<compile_context>
chip_gen: v7x
topology: tpu7x:2x2x1
jax: 0.10.0
libtpu: 0.0.40
codegen_flags: <defaults>
</compile_context>

<pallas_src>
import functools

import jax
import jax.numpy as jnp
from jax.experimental import pallas as pl
from jax.experimental.pallas import tpu as pltpu


LANE = 128     # lane width: hidden feature dims are padded to a multiple of this
SUBLANE = 8    # f32 sublane count: batch tiles are multiples of this


def _round_up(x, m):
    return ((x + m - 1) // m) * m


def _choose_tiling(B, *, tm_cap=1024):
    """Pick (Bp, tm) with Bp % tm == 0 and tm % 8 == 0.

    * Batch is padded only to a multiple of 8 (plus at most 8 rows per tile),
      never to a full tile -> no "B=300 -> Bp=512" style waste.
    * >= 2 grid steps whenever the batch allows, so v7x's second TensorCore is
      used (grid axis is marked "parallel").
    * tm is capped at tm_cap: double-buffered (tm, Din) bf16 input and
      (tm, Dout) f32 output blocks plus the (tm, 128) f32 intermediate stay in
      the low-MiB range, far under even v7x's 64 MiB VMEM.
    """
    Bp = _round_up(B, SUBLANE)
    n_tiles = max(pl.cdiv(Bp, tm_cap), 2 if Bp >= 2 * SUBLANE else 1)
    tm = _round_up(pl.cdiv(Bp, n_tiles), SUBLANE)
    Bp = _round_up(Bp, tm)
    return Bp, tm


def _fused_mlp_kernel(x_ref, *refs, n_layers: int):
    """refs = (w0, b0, w1, b1, ..., w_{n-1}, b_{n-1}, o_ref).

    h = x;  h = relu(h @ Wk + bk) for hidden layers;  o = h @ Wlast + blast.
    MXU operands are bf16, accumulation and the bias/ReLU epilogue are f32.
    Everything stays in vregs/VMEM between layers.
    """
    o_ref = refs[-1]
    h = x_ref[...]                              # bf16 (tm, Din)
    for i in range(n_layers):
        w = refs[2 * i][...]                    # bf16 (din_p, dout_p)
        b = refs[2 * i + 1][...]                # f32  (1, dout_p) broadcasts over rows
        h = jnp.dot(h.astype(jnp.bfloat16), w,
                    preferred_element_type=jnp.float32) + b
        if i != n_layers - 1:
            h = jnp.maximum(h, 0.0)             # f32 epilogue (v5e-safe)
    o_ref[...] = h.astype(o_ref.dtype)


def fused_mlp_pallas(x_pad, padded_params, *, tm: int):
    """x_pad: (Bp, Din) bf16 with Bp % tm == 0; padded_params: [(W_bf16, b_f32), ...]."""
    Bp, din = x_pad.shape
    n_layers = len(padded_params)
    dout = padded_params[-1][0].shape[1]        # true (unpadded) output width

    in_specs = [pl.BlockSpec((tm, din), lambda i: (i, 0))]
    flat_params = []
    for (w, b) in padded_params:
        din_p, dout_p = w.shape
        # Whole-array blocks with constant index_map -> VMEM-resident across tiles.
        in_specs.append(pl.BlockSpec((din_p, dout_p), lambda i: (0, 0)))
        in_specs.append(pl.BlockSpec((1, dout_p), lambda i: (0, 0)))
        flat_params.extend([w, b])

    kernel = functools.partial(_fused_mlp_kernel, n_layers=n_layers)
    return pl.pallas_call(
        kernel,
        out_shape=jax.ShapeDtypeStruct((Bp, dout), jnp.float32),
        grid_spec=pl.GridSpec(
            grid=(Bp // tm,),
            in_specs=in_specs,
            out_specs=pl.BlockSpec((tm, dout), lambda i: (i, 0)),
        ),
        compiler_params=pltpu.CompilerParams(
            dimension_semantics=("parallel",),   # megacore-shards batch tiles on v7x
        ),
    )(x_pad, *flat_params)


def init_fc_params(key, dims):
    """Deterministic init mimicking nn.Linear's U(-1/sqrt(fan_in), 1/sqrt(fan_in)).

    Weights stored as (in_features, out_features) (transposed vs. PyTorch) so the
    kernel computes o = x @ W + b directly; bias stored as (1, out_features).
    """
    params = []
    for k in range(len(dims) - 1):
        fan_in, fan_out = dims[k], dims[k + 1]
        key, kw, kb = jax.random.split(key, 3)
        bound = 1.0 / jnp.sqrt(jnp.float32(fan_in))
        w = jax.random.uniform(kw, (fan_in, fan_out), jnp.float32, -bound, bound)
        b = jax.random.uniform(kb, (1, fan_out), jnp.float32, -bound, bound)
        params.append((w, b))
    return params


def pad_fc_params(params):
    """Prepare MXU-friendly parameters.

    * Hidden feature dims are zero-padded to multiples of 128 -> lane-dense
      intermediate matmuls (zero rows/cols keep the math exact through ReLU).
    * The layer-0 input dim and the final output dim are left UNPADDED: x is the
      dominant HBM read and (B, Dout) the only HBM write, so padding them only
      inflates DMA traffic.
    * Weights are cast to bf16 (MXU operands); biases stay f32 (f32 epilogue).
    """
    n_layers = len(params)
    padded = []
    in_p = params[0][0].shape[0]                 # layer 0 keeps true Din
    for i, (w, b) in enumerate(params):
        din, dout = w.shape
        out_p = dout if i == n_layers - 1 else _round_up(dout, LANE)
        w_p = jnp.zeros((in_p, out_p), jnp.float32).at[:din, :dout].set(w)
        b_p = jnp.zeros((1, out_p), jnp.float32).at[:, :dout].set(b)
        padded.append((w_p.astype(jnp.bfloat16), b_p))
        in_p = out_p                             # next layer's input = this padded output
    return padded


def fc_network_forward(x, padded_params):
    """Forward pass: ReLU between layers, no activation at the end (matches FCNetwork)."""
    B, din = x.shape
    Bp, tm = _choose_tiling(B)
    x_bf = x.astype(jnp.bfloat16)                # halves the kernel's x DMA bytes
    if Bp != B:
        x_bf = jnp.zeros((Bp, din), jnp.bfloat16).at[:B].set(x_bf)
    out = fused_mlp_pallas(x_bf, padded_params, tm=tm)
    return out[:B]                               # output cols are already unpadded


def fc_network_ref(x, params):
    """Pure-JAX f32 reference for correctness check."""
    n_layers = len(params)
    for i, (w, b) in enumerate(params):
        x = x @ w + b
        if i != n_layers - 1:
            x = jnp.maximum(x, 0.0)
    return x


if __name__ == "__main__":
    # dims = (in, hidden..., out), matching FCNetwork((32, 64, 48, 5))
    dims = (32, 64, 48, 5)
    batch = 8

    key = jax.random.PRNGKey(0)
    key, kx = jax.random.split(key)
    x = jax.random.normal(kx, (batch, dims[0]), jnp.float32)
    params = init_fc_params(key, dims)
    padded_params = pad_fc_params(params)

    out = fc_network_forward(x, padded_params)
    out = jax.block_until_ready(out)

    ref = fc_network_ref(x, params)
    assert out.shape == (batch, dims[-1])
    # bf16 MXU operands with f32 accumulation -> relaxed tolerance vs. the f32 reference.
    assert jnp.allclose(out, ref, atol=2e-2, rtol=2e-2)

    # TODO(synk): hard_update / soft_update are parameter-copy utilities (no forward
    # compute); they are plain jnp ops outside the kernel and are not implemented here.
    print("KERNEL_OK")
</pallas_src>

<mosaic_0001>
module attributes {stable_mosaic.version = 11 : i64} {
  func.func @_fused_mlp_kernel(%arg0: i32, %arg1: memref<8x32xbf16, #tpu.memory_space<vmem>>, %arg2: memref<32x128xbf16, #tpu.memory_space<vmem>>, %arg3: memref<1x128xf32, #tpu.memory_space<vmem>>, %arg4: memref<128x128xbf16, #tpu.memory_space<vmem>>, %arg5: memref<1x128xf32, #tpu.memory_space<vmem>>, %arg6: memref<128x5xbf16, #tpu.memory_space<vmem>>, %arg7: memref<1x5xf32, #tpu.memory_space<vmem>>, %arg8: memref<8x5xf32, #tpu.memory_space<vmem>>) attributes {dimension_semantics = [#tpu.dimension_semantics<parallel>], iteration_bounds = array<i64: 1>, scalar_prefetch = 0 : i64, scratch_operands = 0 : i64, tpu.core_type = #tpu.core_type<tc>, window_params = [{transform_indices = @transform_0, window_bounds = array<i64: 8, 32>}, {pipeline_mode = #tpu.pipeline_mode<synchronous>, transform_indices = @transform_1, window_bounds = array<i64: 32, 128>}, {pipeline_mode = #tpu.pipeline_mode<synchronous>, transform_indices = @transform_2, window_bounds = array<i64: 1, 128>}, {pipeline_mode = #tpu.pipeline_mode<synchronous>, transform_indices = @transform_3, window_bounds = array<i64: 128, 128>}, {pipeline_mode = #tpu.pipeline_mode<synchronous>, transform_indices = @transform_4, window_bounds = array<i64: 1, 128>}, {pipeline_mode = #tpu.pipeline_mode<synchronous>, transform_indices = @transform_5, window_bounds = array<i64: 128, 5>}, {pipeline_mode = #tpu.pipeline_mode<synchronous>, transform_indices = @transform_6, window_bounds = array<i64: 1, 5>}, {transform_indices = @transform_7, window_bounds = array<i64: 8, 5>}]} {
    %c0 = arith.constant 0 : index
    %c0_0 = arith.constant 0 : index
    %0 = vector.load %arg1[%c0, %c0_0] : memref<8x32xbf16, #tpu.memory_space<vmem>>, vector<8x32xbf16>
    %c0_1 = arith.constant 0 : index
    %c0_2 = arith.constant 0 : index
    %1 = vector.load %arg2[%c0_1, %c0_2] : memref<32x128xbf16, #tpu.memory_space<vmem>>, vector<32x128xbf16>
    %c0_3 = arith.constant 0 : index
    %c0_4 = arith.constant 0 : index
    %2 = vector.load %arg3[%c0_3, %c0_4] : memref<1x128xf32, #tpu.memory_space<vmem>>, vector<1x128xf32>
    %cst = arith.constant dense<0.000000e+00> : vector<8x128xf32>
    %3 = tpu.matmul %0, %1, %cst {dimension_numbers = #tpu.dot_dimension_numbers<[1], [0], [0], [1], [0, 0, 1, 1], [], []>} : vector<8x32xbf16>, vector<32x128xbf16>, vector<8x128xf32> -> vector<8x128xf32>
    %4 = vector.broadcast %2 : vector<1x128xf32> to vector<8x128xf32>
    %5 = arith.addf %3, %4 : vector<8x128xf32>
    %cst_5 = arith.constant 0.000000e+00 : f32
    %6 = vector.broadcast %cst_5 : f32 to vector<8x128xf32>
    %7 = arith.maximumf %5, %6 : vector<8x128xf32>
    %c0_6 = arith.constant 0 : index
    %c0_7 = arith.constant 0 : index
    %8 = vector.load %arg4[%c0_6, %c0_7] : memref<128x128xbf16, #tpu.memory_space<vmem>>, vector<128x128xbf16>
    %c0_8 = arith.constant 0 : index
    %c0_9 = arith.constant 0 : index
    %9 = vector.load %arg5[%c0_8, %c0_9] : memref<1x128xf32, #tpu.memory_space<vmem>>, vector<1x128xf32>
    %10 = arith.truncf %7 : vector<8x128xf32> to vector<8x128xbf16>
    %cst_10 = arith.constant dense<0.000000e+00> : vector<8x128xf32>
    %11 = tpu.matmul %10, %8, %cst_10 {dimension_numbers = #tpu.dot_dimension_numbers<[1], [0], [0], [1], [0, 0, 1, 1], [], []>} : vector<8x128xbf16>, vector<128x128xbf16>, vector<8x128xf32> -> vector<8x128xf32>
    %12 = vector.broadcast %9 : vector<1x128xf32> to vector<8x128xf32>
    %13 = arith.addf %11, %12 : vector<8x128xf32>
    %cst_11 = arith.constant 0.000000e+00 : f32
    %14 = vector.broadcast %cst_11 : f32 to vector<8x128xf32>
    %15 = arith.maximumf %13, %14 : vector<8x128xf32>
    %c0_12 = arith.constant 0 : index
    %c0_13 = arith.constant 0 : index
    %16 = vector.load %arg6[%c0_12, %c0_13] : memref<128x5xbf16, #tpu.memory_space<vmem>>, vector<128x5xbf16>
    %c0_14 = arith.constant 0 : index
    %c0_15 = arith.constant 0 : index
    %17 = vector.load %arg7[%c0_14, %c0_15] : memref<1x5xf32, #tpu.memory_space<vmem>>, vector<1x5xf32>
    %18 = arith.truncf %15 : vector<8x128xf32> to vector<8x128xbf16>
    %cst_16 = arith.constant dense<0.000000e+00> : vector<8x5xf32>
    %19 = tpu.matmul %18, %16, %cst_16 {dimension_numbers = #tpu.dot_dimension_numbers<[1], [0], [0], [1], [0, 0, 1, 1], [], []>} : vector<8x128xbf16>, vector<128x5xbf16>, vector<8x5xf32> -> vector<8x5xf32>
    %20 = vector.broadcast %17 : vector<1x5xf32> to vector<8x5xf32>
    %21 = arith.addf %19, %20 : vector<8x5xf32>
    %c0_17 = arith.constant 0 : index
    %c0_18 = arith.constant 0 : index
    %22 = vector.load %arg8[%c0_17, %c0_18] : memref<8x5xf32, #tpu.memory_space<vmem>>, vector<8x5xf32>
    tpu.vector_store %arg8[%c0_17, %c0_18], %21 {strides = array<i32>} : memref<8x5xf32, #tpu.memory_space<vmem>>, vector<8x5xf32>,
    return
  }
  func.func @transform_0(%arg0: i32) -> (i32, i32) {
    %c0_i32 = arith.constant 0 : i32
    %c0_i32_0 = arith.constant 0 : i32
    return %arg0, %c0_i32 : i32, i32
  }
  func.func @transform_1(%arg0: i32) -> (i32, i32) {
    %c0_i32 = arith.constant 0 : i32
    %c0_i32_0 = arith.constant 0 : i32
    %c0_i32_1 = arith.constant 0 : i32
    return %c0_i32, %c0_i32_0 : i32, i32
  }
  func.func @transform_2(%arg0: i32) -> (i32, i32) {
    %c0_i32 = arith.constant 0 : i32
    %c0_i32_0 = arith.constant 0 : i32
    %c0_i32_1 = arith.constant 0 : i32
    return %c0_i32, %c0_i32_0 : i32, i32
  }
  func.func @transform_3(%arg0: i32) -> (i32, i32) {
    %c0_i32 = arith.constant 0 : i32
    %c0_i32_0 = arith.constant 0 : i32
    %c0_i32_1 = arith.constant 0 : i32
    return %c0_i32, %c0_i32_0 : i32, i32
  }
  func.func @transform_4(%arg0: i32) -> (i32, i32) {
    %c0_i32 = arith.constant 0 : i32
    %c0_i32_0 = arith.constant 0 : i32
    %c0_i32_1 = arith.constant 0 : i32
    return %c0_i32, %c0_i32_0 : i32, i32
  }
  func.func @transform_5(%arg0: i32) -> (i32, i32) {
    %c0_i32 = arith.constant 0 : i32
    %c0_i32_0 = arith.constant 0 : i32
    %c0_i32_1 = arith.constant 0 : i32
    return %c0_i32, %c0_i32_0 : i32, i32
  }
  func.func @transform_6(%arg0: i32) -> (i32, i32) {
    %c0_i32 = arith.constant 0 : i32
    %c0_i32_0 = arith.constant 0 : i32
    %c0_i32_1 = arith.constant 0 : i32
    return %c0_i32, %c0_i32_0 : i32, i32
  }
  func.func @transform_7(%arg0: i32) -> (i32, i32) {
    %c0_i32 = arith.constant 0 : i32
    %c0_i32_0 = arith.constant 0 : i32
    return %arg0, %c0_i32 : i32, i32
  }
}

</mosaic_0001>

<llo_original>
// kernel: tpu_custom_call.1
$region0: #{tpu_custom_call.1}
  #allocation0 [shape = 'u32[]', space=smem, size = 0x4, offset = 0x4, fixed_abs, tag = 'smem constant byte address 0x4 - core index']
  #allocation1 [shape = 'u32[144,128]{1,0:T(1,128)}', space=vmem, size = 0x12000, scoped, tag = 'internal scratch']
  %s0 = inlined_call_operand.vmem [shape: bf16[8,32], index: 0, kind: input, shape index: {}]
  %s1 = inlined_call_operand.hbm [shape: bf16[32,128], index: 1, kind: input, shape index: {}]
  %s2 = inlined_call_operand.vmem [shape: f32[1,128], index: 2, kind: input, shape index: {}]
  %s3 = inlined_call_operand.vmem [shape: bf16[128,128], index: 3, kind: input, shape index: {}]
  %s4 = inlined_call_operand.vmem [shape: f32[1,128], index: 4, kind: input, shape index: {}]
  %s5 = inlined_call_operand.vmem [shape: bf16[128,5], index: 5, kind: input, shape index: {}]
  %s6 = inlined_call_operand.vmem [shape: f32[1,5], index: 6, kind: input, shape index: {}]
  %s7 = inlined_call_operand.hbm [shape: f32[8,5], index: 7, kind: output, shape index: {}]
  %s8 = sld [smem:[#allocation0]]
  $region42: #{tpu_custom_call.1} parent=0
    _
  %s10 = ssub.s32 1, %s8
  %s11 = scalar_select 0, %s10, %s8
  $region1: #{tpu_custom_call.1} parent=0
    #allocation2 [shape = 'u8[8192]{0}', space=vmem, size = 0x2000, scoped, tag = 'input window, operand 1, single buffered']
    #allocation3 [shape = 's32[1]{0}', space=sflag, size = 0x4, scoped, tag = 'scoped memory for tpu_custom_call.1']
    #allocation4 [shape = 's32[1]{0}', space=sflag, size = 0x4, scoped, tag = 'scoped memory for tpu_custom_call.1']
    #allocation5 [shape = 'u8[4096]{0}', space=vmem, size = 0x1000, scoped, tag = 'output window, operand 0, single buffered']
    %12 = vsyncpa [#allocation3], 0
    %13 = vsyncpa [#allocation4], 0
    // Predicated region
    $region2: #{tpu_custom_call.1} parent=1 // pred_check
      _
    $region3: #{tpu_custom_call.1} parent=1 // pred_check_branch
      %15 = sbr.rel (0) target = $region5
    $region4: #{tpu_custom_call.1} parent=1 // pred_region
      _
    $region5: #{tpu_custom_call.1} parent=1 // pred_fallthru
      _
    // Predicated region
    $region6: #{tpu_custom_call.1} parent=1 // pred_check
      _
    $region7: #{tpu_custom_call.1} parent=1 // pred_check_branch
      %17 = sbr.rel (0) target = $region9
    $region8: #{tpu_custom_call.1} parent=1 // pred_region
      %s19 = ssub.s32 256, 256
      %20 = vsyncadd [#allocation3], %s19
      %s21 = sshll.u32 [#allocation2], 4
      %s22 = int_to_ptr.vmem [resolvable:$true] %s21
      %27 = dma.hbm_to_vmem [thread:$0]  %s1, 256, %s22, [#allocation3], 64, 64, 4
    $region9: #{tpu_custom_call.1} parent=1 // pred_fallthru
      _
    // Predicated region
    $region10: #{tpu_custom_call.1} parent=1 // pred_check
      _
    $region11: #{tpu_custom_call.1} parent=1 // pred_check_branch
      %29 = sbr.rel (0) target = $region13
    $region12: #{tpu_custom_call.1} parent=1 // pred_region
      _
    $region13: #{tpu_custom_call.1} parent=1 // pred_fallthru
      _
    // Predicated region
    $region14: #{tpu_custom_call.1} parent=1 // pred_check
      _
    $region15: #{tpu_custom_call.1} parent=1 // pred_check_branch
      %31 = sbr.rel (0) target = $region17
    $region16: #{tpu_custom_call.1} parent=1 // pred_region
      _
    $region17: #{tpu_custom_call.1} parent=1 // pred_fallthru
      _
    // Predicated region
    $region18: #{tpu_custom_call.1} parent=1 // pred_check
      _
    $region19: #{tpu_custom_call.1} parent=1 // pred_check_branch
      %33 = sbr.rel (0) target = $region21
    $region20: #{tpu_custom_call.1} parent=1 // pred_region
      _
    $region21: #{tpu_custom_call.1} parent=1 // pred_fallthru
      _
    // Predicated region
    $region22: #{tpu_custom_call.1} parent=1 // pred_check
      _
    $region23: #{tpu_custom_call.1} parent=1 // pred_check_branch
      %35 = sbr.rel (0) target = $region25
    $region24: #{tpu_custom_call.1} parent=1 // pred_region
      _
    $region25: #{tpu_custom_call.1} parent=1 // pred_fallthru
      _
    // Predicated region
    $region26: #{tpu_custom_call.1} parent=1 // pred_check
      _
    $region27: #{tpu_custom_call.1} parent=1 // pred_check_branch
      %37 = sbr.rel (0) target = $region29
    $region28: #{tpu_custom_call.1} parent=1 // pred_region
      _
    $region29: #{tpu_custom_call.1} parent=1 // pred_fallthru
      _
    // Predicated region
    $region30: #{tpu_custom_call.1} parent=1 // pred_check
      _
    $region31: #{tpu_custom_call.1} parent=1 // pred_check_branch
      %39 = sbr.rel (0) target = $region33
    $region32: #{tpu_custom_call.1} parent=1 // pred_region
      %40 = dma.done [#allocation3], 256
    $region33: #{tpu_custom_call.1} parent=1 // pred_fallthru
      _
    %v42 = vld [vmem:[%s0] sm:$0xf]
    %v43 = vld [vmem:[#allocation2] sm:$0xf]
    %v44 = vld [vmem:[#allocation2 + $0x4] sm:$0xf]
    %v45 = vld [vmem:[#allocation2 + $0x8] sm:$0xf]
    %v46 = vld [vmem:[#allocation2 + $0xc] sm:$0xf]
    %v47 = vld [vmem:[%s2] sm:$0x1]
    %v49 = vlaneseq
    %v50 = vshrl.u32 %v49, 7
    %v51 = vsub.s32 0, %v50
    %v52 = vrot.slane %v47, %v51
    %v58 = vunpack.c.l.b16 %v43
    %v59 = vunpack.c.l.b16 %v44
    %v60 = vunpack.c.l.b16 %v45
    %v61 = vunpack.c.l.b16 %v46
    %v62 = vpack.c.b16 %v59, %v58
    %v63 = vpack.c.b16 %v61, %v60
    %vm66 = vcmask 261120
    %v68 = vsel %vm66, %v42, 0
    %70 = vmatprep.subr.bf16.mxu0 0
    %71 = vmatpush1.bf16.msra.mxu0 %v62
    %72 = vmatprep.subr.bf16.mxu0 0
    %73 = vmatpush1.bf16.msra.mxu0 %v63
    %74 = vmatprep.subr.bf16.mxu0 0
    %75 = vmatpush1.bf16.msra.mxu0 0
    %76 = vmatprep.subr.bf16.mxu0 0
    %77 = vmatpush1.bf16.msra.mxu0 0
    %78 = vmatprep.subr.bf16.mxu0 0
    %79 = vmatpush1.bf16.msra.mxu0 0
    %80 = vmatprep.subr.bf16.mxu0 0
    %81 = vmatpush1.bf16.msra.mxu0 0
    %82 = vmatprep.subr.bf16.mxu0 0
    %83 = vmatpush1.bf16.msra.mxu0 0
    %84 = vmatprep.subr.bf16.mxu0 0
    %85 = vmatpush1.bf16.msra.mxu0 0
    %86 = vmatprep.subr.bf16.mxu0 0
    %87 = vmatpush1.bf16.msra.mxu0 0
    %88 = vmatprep.subr.bf16.mxu0 0
    %89 = vmatpush1.bf16.msra.mxu0 0
    %90 = vmatprep.subr.bf16.mxu0 0
    %91 = vmatpush1.bf16.msra.mxu0 0
    %92 = vmatprep.subr.bf16.mxu0 0
    %93 = vmatpush1.bf16.msra.mxu0 0
    %94 = vmatprep.subr.bf16.mxu0 0
    %95 = vmatpush1.bf16.msra.mxu0 0
    %96 = vmatprep.subr.bf16.mxu0 0
    %97 = vmatpush1.bf16.msra.mxu0 0
    %98 = vmatprep.subr.bf16.mxu0 0
    %99 = vmatpush1.bf16.msra.mxu0 0
    %100 = vmatprep.subr.bf16.mxu0 0
    %101 = vmatpush1.bf16.msra.mxu0 0
    %102 = vmatprep.mubr.bf16.mxu0 0
    %103 = vmatmul.mubr.bf16.gmra.mrb[0].mxu0 %v68
    %v104 = vpop.f32.mrb[0].mxu0
    %v105 = vadd.f32 %v52, %v104
    %v106 = vpop.f32.mrb[0].mxu0
    %v107 = vpop.f32.mrb[0].mxu0
    %v108 = vpop.f32.mrb[0].mxu0
    %109 = vdwg.mxu0
    %v110 = vmax.f32 %v105, 0.0
    %v111 = vld [vmem:[%s3] sm:$0xf]
    %v112 = vld [vmem:[%s3 + $0x4] sm:$0xf]
    %v113 = vld [vmem:[%s3 + $0x8] sm:$0xf]
    %v114 = vld [vmem:[%s3 + $0xc] sm:$0xf]
    %v115 = vld [vmem:[%s3 + $0x10] sm:$0xf]
    %v116 = vld [vmem:[%s3 + $0x14] sm:$0xf]
    %v117 = vld [vmem:[%s3 + $0x18] sm:$0xf]
    %v118 = vld [vmem:[%s3 + $0x1c] sm:$0xf]
    %v119 = vld [vmem:[%s3 + $0x20] sm:$0xf]
    %v120 = vld [vmem:[%s3 + $0x24] sm:$0xf]
    %v121 = vld [vmem:[%s3 + $0x28] sm:$0xf]
    %v122 = vld [vmem:[%s3 + $0x2c] sm:$0xf]
    %v123 = vld [vmem:[%s3 + $0x30] sm:$0xf]
    %v124 = vld [vmem:[%s3 + $0x34] sm:$0xf]
    %v125 = vld [vmem:[%s3 + $0x38] sm:$0xf]
    %v126 = vld [vmem:[%s3 + $0x3c] sm:$0xf]
    %v127 = vld [vmem:[%s4] sm:$0x1]
    %v128 = vpack.c.bf16 %v110, %v110
    %v130 = vlaneseq
    %v131 = vshrl.u32 %v130, 7
    %v132 = vsub.s32 0, %v131
    %v133 = vrot.slane %v127, %v132
    %v151 = vunpack.c.l.b16 %v111
    %v152 = vunpack.c.l.b16 %v112
    %v153 = vunpack.c.l.b16 %v113
    %v154 = vunpack.c.l.b16 %v114
    %v155 = vunpack.c.l.b16 %v115
    %v156 = vunpack.c.l.b16 %v116
    %v157 = vunpack.c.l.b16 %v117
    %v158 = vunpack.c.l.b16 %v118
    %v159 = vunpack.c.l.b16 %v119
    %v160 = vunpack.c.l.b16 %v120
    %v161 = vunpack.c.l.b16 %v121
    %v162 = vunpack.c.l.b16 %v122
    %v163 = vunpack.c.l.b16 %v123
    %v164 = vunpack.c.l.b16 %v124
    %v165 = vunpack.c.l.b16 %v125
    %v166 = vunpack.c.l.b16 %v126
    %v167 = vpack.c.b16 %v152, %v151
    %v168 = vpack.c.b16 %v154, %v153
    %v169 = vpack.c.b16 %v156, %v155
    %v170 = vpack.c.b16 %v158, %v157
    %v171 = vpack.c.b16 %v160, %v159
    %v172 = vpack.c.b16 %v162, %v161
    %v173 = vpack.c.b16 %v164, %v163
    %v174 = vpack.c.b16 %v166, %v165
    %183 = vmatprep.subr.bf16.mxu0 0
    %184 = vmatpush1.bf16.msra.mxu0 %v167
    %185 = vmatprep.subr.bf16.mxu0 0
    %186 = vmatpush1.bf16.msra.mxu0 %v168
    %187 = vmatprep.subr.bf16.mxu0 0
    %188 = vmatpush1.bf16.msra.mxu0 %v169
    %189 = vmatprep.subr.bf16.mxu0 0
    %190 = vmatpush1.bf16.msra.mxu0 %v170
    %191 = vmatprep.subr.bf16.mxu0 0
    %192 = vmatpush1.bf16.msra.mxu0 %v171
    %193 = vmatprep.subr.bf16.mxu0 0
    %194 = vmatpush1.bf16.msra.mxu0 %v172
    %195 = vmatprep.subr.bf16.mxu0 0
    %196 = vmatpush1.bf16.msra.mxu0 %v173
    %197 = vmatprep.subr.bf16.mxu0 0
    %198 = vmatpush1.bf16.msra.mxu0 %v174
    %199 = vmatprep.subr.bf16.mxu0 0
    %200 = vmatpush1.bf16.msra.mxu0 0
    %201 = vmatprep.subr.bf16.mxu0 0
    %202 = vmatpush1.bf16.msra.mxu0 0
    %203 = vmatprep.subr.bf16.mxu0 0
    %204 = vmatpush1.bf16.msra.mxu0 0
    %205 = vmatprep.subr.bf16.mxu0 0
    %206 = vmatpush1.bf16.msra.mxu0 0
    %207 = vmatprep.subr.bf16.mxu0 0
    %208 = vmatpush1.bf16.msra.mxu0 0
    %209 = vmatprep.subr.bf16.mxu0 0
    %210 = vmatpush1.bf16.msra.mxu0 0
    %211 = vmatprep.subr.bf16.mxu0 0
    %212 = vmatpush1.bf16.msra.mxu0 0
    %213 = vmatprep.subr.bf16.mxu0 0
    %214 = vmatpush1.bf16.msra.mxu0 0
    %215 = vmatprep.mubr.bf16.mxu0 0
    %216 = vmatmul.mubr.bf16.gmra.mrb[0].mxu0 %v128
    %v217 = vpop.f32.mrb[0].mxu0
    %v218 = vadd.f32 %v133, %v217
    %v219 = vpop.f32.mrb[0].mxu0
    %v220 = vpop.f32.mrb[0].mxu0
    %v221 = vpop.f32.mrb[0].mxu0
    %222 = vdwg.mxu0
    %v223 = vmax.f32 %v218, 0.0
    %v224 = vld [vmem:[%s5] sm:$0xf]
    %v225 = vld [vmem:[%s5 + $0x4] sm:$0xf]
    %v226 = vld [vmem:[%s5 + $0x8] sm:$0xf]
    %v227 = vld [vmem:[%s5 + $0xc] sm:$0xf]
    %v228 = vld [vmem:[%s5 + $0x10] sm:$0xf]
    %v229 = vld [vmem:[%s5 + $0x14] sm:$0xf]
    %v230 = vld [vmem:[%s5 + $0x18] sm:$0xf]
    %v231 = vld [vmem:[%s5 + $0x1c] sm:$0xf]
    %v232 = vld [vmem:[%s5 + $0x20] sm:$0xf]
    %v233 = vld [vmem:[%s5 + $0x24] sm:$0xf]
    %v234 = vld [vmem:[%s5 + $0x28] sm:$0xf]
    %v235 = vld [vmem:[%s5 + $0x2c] sm:$0xf]
    %v236 = vld [vmem:[%s5 + $0x30] sm:$0xf]
    %v237 = vld [vmem:[%s5 + $0x34] sm:$0xf]
    %v238 = vld [vmem:[%s5 + $0x38] sm:$0xf]
    %v239 = vld [vmem:[%s5 + $0x3c] sm:$0xf]
    %v240 = vld [vmem:[%s6] sm:$0x1]
    %v241 = vpack.c.bf16 %v223, %v223
    %v243 = vlaneseq
    %v244 = vshrl.u32 %v243, 7
    %v245 = vsub.s32 0, %v244
    %v246 = vrot.slane %v240, %v245
    %v264 = vunpack.c.l.b16 %v224
    %v265 = vunpack.c.l.b16 %v225
    %v266 = vunpack.c.l.b16 %v226
    %v267 = vunpack.c.l.b16 %v227
    %v268 = vunpack.c.l.b16 %v228
    %v269 = vunpack.c.l.b16 %v229
    %v270 = vunpack.c.l.b16 %v230
    %v271 = vunpack.c.l.b16 %v231
    %v272 = vunpack.c.l.b16 %v232
    %v273 = vunpack.c.l.b16 %v233
    %v274 = vunpack.c.l.b16 %v234
    %v275 = vunpack.c.l.b16 %v235
    %v276 = vunpack.c.l.b16 %v236
    %v277 = vunpack.c.l.b16 %v237
    %v278 = vunpack.c.l.b16 %v238
    %v279 = vunpack.c.l.b16 %v239
    %v280 = vpack.c.b16 %v265, %v264
    %v281 = vpack.c.b16 %v267, %v266
    %v282 = vpack.c.b16 %v269, %v268
    %v283 = vpack.c.b16 %v271, %v270
    %v284 = vpack.c.b16 %v273, %v272
    %v285 = vpack.c.b16 %v275, %v274
    %v286 = vpack.c.b16 %v277, %v276
    %v287 = vpack.c.b16 %v279, %v278
    %296 = vmatprep.subr.bf16.mxu0 0
    %297 = vmatpush1.bf16.msra.mxu0 %v280
    %298 = vmatprep.subr.bf16.mxu0 0
    %299 = vmatpush1.bf16.msra.mxu0 %v281
    %300 = vmatprep.subr.bf16.mxu0 0
    %301 = vmatpush1.bf16.msra.mxu0 %v282
    %302 = vmatprep.subr.bf16.mxu0 0
    %303 = vmatpush1.bf16.msra.mxu0 %v283
    %304 = vmatprep.subr.bf16.mxu0 0
    %305 = vmatpush1.bf16.msra.mxu0 %v284
    %306 = vmatprep.subr.bf16.mxu0 0
    %307 = vmatpush1.bf16.msra.mxu0 %v285
    %308 = vmatprep.subr.bf16.mxu0 0
    %309 = vmatpush1.bf16.msra.mxu0 %v286
    %310 = vmatprep.subr.bf16.mxu0 0
    %311 = vmatpush1.bf16.msra.mxu0 %v287
    %312 = vmatprep.subr.bf16.mxu0 0
    %313 = vmatpush1.bf16.msra.mxu0 0
    %314 = vmatprep.subr.bf16.mxu0 0
    %315 = vmatpush1.bf16.msra.mxu0 0
    %316 = vmatprep.subr.bf16.mxu0 0
    %317 = vmatpush1.bf16.msra.mxu0 0
    %318 = vmatprep.subr.bf16.mxu0 0
    %319 = vmatpush1.bf16.msra.mxu0 0
    %320 = vmatprep.subr.bf16.mxu0 0
    %321 = vmatpush1.bf16.msra.mxu0 0
    %322 = vmatprep.subr.bf16.mxu0 0
    %323 = vmatpush1.bf16.msra.mxu0 0
    %324 = vmatprep.subr.bf16.mxu0 0
    %325 = vmatpush1.bf16.msra.mxu0 0
    %326 = vmatprep.subr.bf16.mxu0 0
    %327 = vmatpush1.bf16.msra.mxu0 0
    %328 = vmatprep.mubr.bf16.mxu0 0
    %329 = vmatmul.mubr.bf16.gmra.mrb[0].mxu0 %v241
    %v330 = vpop.f32.mrb[0].mxu0
    %v331 = vadd.f32 %v246, %v330
    %v332 = vpop.f32.mrb[0].mxu0
    %v333 = vpop.f32.mrb[0].mxu0
    %v334 = vpop.f32.mrb[0].mxu0
    %335 = vdwg.mxu0
    %vm336 = vcmask 39936
    %337 = vst.msk [vmem:[#allocation5] sm:$0xff] %vm336, %v331
    // Predicated region
    $region34: #{tpu_custom_call.1} parent=1 // pred_check
      _
    $region35: #{tpu_custom_call.1} parent=1 // pred_check_branch
      %339 = sbr.rel (0) target = $region37
    $region36: #{tpu_custom_call.1} parent=1 // pred_region
      %s341 = ssub.s32 128, 128
      %342 = vsyncadd [#allocation4], %s341
      %s344 = sshll.u32 [#allocation5], 4
      %s345 = int_to_ptr.vmem [resolvable:$true] %s344
      %347 = dma.vmem_to_hbm [thread:$0]  %s345, 128, %s7, [#allocation4]
    $region37: #{tpu_custom_call.1} parent=1 // pred_fallthru
      _
    // Predicated region
    $region38: #{tpu_custom_call.1} parent=1 // pred_check
      _
    $region39: #{tpu_custom_call.1} parent=1 // pred_check_branch
      %349 = sbr.rel (0) target = $region41
    $region40: #{tpu_custom_call.1} parent=1 // pred_region
      %350 = dma.done [#allocation4], 128
    $region41: #{tpu_custom_call.1} parent=1 // pred_fallthru
      _
    %351 = vsyncpa [#allocation3], 1
    %352 = vsyncpa [#allocation4], 1

</llo_original>
